<compile_context>
chip_gen: v5e
topology: v5e:2x2
jax: 0.10.0
libtpu: 0.0.40
codegen_flags: <defaults>
</compile_context>

<pallas_src>
import jax
import jax.numpy as jnp
from jax.experimental import pallas as pl
from jax.experimental.pallas import tpu as pltpu


def _round_up(n: int, m: int) -> int:
    return ((n + m - 1) // m) * m


def _cdiv(a: int, b: int) -> int:
    return -(-a // b)


def _gated_head_kernel(x_ref, xc_ref, wg_ref, bg_ref, wf_ref, bf_ref,
                       o_ref, acc_ref):
    n = pl.program_id(1)

    @pl.when(n == 0)
    def _init():
        acc_ref[...] = jnp.zeros_like(acc_ref)

    # gate chunk = sigmoid(x @ Wg[:, chunk] + bg[chunk]); f32 MXU accumulate,
    # sigmoid runs on the EUP (its own bundle slot).
    g = jnp.dot(x_ref[...], wg_ref[...], preferred_element_type=jnp.float32)
    gate = jax.nn.sigmoid(g + bg_ref[...].astype(jnp.float32))

    # relu(sigmoid(.) * x) == where(x > 0, sigmoid(.) * x, 0) since sigmoid >= 0:
    # one VPU select instead of mul+max.  bf16 inputs keep the epilogue in bf16
    # (halves vreg pressure on v6e/v7x); otherwise f32.
    xc = xc_ref[...]
    if xc.dtype == jnp.bfloat16:
        h = jnp.where(xc > 0, gate.astype(jnp.bfloat16) * xc, jnp.zeros_like(xc))
    else:
        xf = xc.astype(jnp.float32)
        h = jnp.where(xf > 0.0, gate * xf, 0.0)

    # Partial fc product for this chunk of the contraction, accumulated in f32.
    acc_ref[...] += jnp.dot(h.astype(wf_ref.dtype), wf_ref[...],
                            preferred_element_type=jnp.float32)

    @pl.when(n == pl.num_programs(1) - 1)
    def _finish():
        o_ref[...] = (acc_ref[...] + bf_ref[...].astype(jnp.float32)
                      ).astype(o_ref.dtype)


def prepare_gated_head_params(w_gate, b_gate, w_fc, b_fc, *, param_dtype=None):
    """One-time parameter prep (call once, reuse across forwards).

    Takes nn.Linear-layout params (weight [out, in], bias [out]), transposes
    the weights to [in, out] and zero-pads feature dims to lane multiples of
    128 (exact: padded lanes/rows only ever multiply zeros).
    `param_dtype=jnp.bfloat16` casts the weights for the fast MXU path;
    biases keep their dtype (added to the f32 accumulator in-kernel).
    """
    D = w_gate.shape[1]
    O = w_fc.shape[0]
    Dp = _round_up(D, 128)
    Op = _round_up(O, 128)

    wg = jnp.asarray(w_gate).T                      # [in=D, out=D]
    wf = jnp.asarray(w_fc).T                        # [in=D, out=O]
    bg = jnp.asarray(b_gate).reshape(1, D)
    bf = jnp.asarray(b_fc).reshape(1, O)
    if param_dtype is not None:
        wg = wg.astype(param_dtype)
        wf = wf.astype(param_dtype)
    if Dp != D or Op != O:
        wg = jnp.pad(wg, ((0, Dp - D), (0, Dp - D)))
        bg = jnp.pad(bg, ((0, 0), (0, Dp - D)))
        wf = jnp.pad(wf, ((0, Dp - D), (0, Op - O)))
        bf = jnp.pad(bf, ((0, 0), (0, Op - O)))
    return {"wg": wg, "bg": bg, "wf": wf, "bf": bf, "D": D, "O": O}


def gated_head(x, params, *, batch_tile=256,
               vmem_budget_bytes=24 * 1024 * 1024):
    """x: [..., D] -> [..., O].  batch_tile: 128 tends to be better on v5e;
    sweep up to 512 on v6e (128 MiB physical VMEM)."""
    wg, bg, wf, bf = params["wg"], params["bg"], params["wf"], params["bf"]
    D, O = params["D"], params["O"]
    Dp, Op = wg.shape[0], wf.shape[1]

    lead = x.shape[:-1]
    x2 = x.reshape(-1, D)
    B = x2.shape[0]

    isx = jnp.dtype(x2.dtype).itemsize
    isw = jnp.dtype(wg.dtype).itemsize
    isbg = jnp.dtype(bg.dtype).itemsize
    isbf = jnp.dtype(bf.dtype).itemsize
    sub = max(8, 32 // isx)            # sublane packing: f32 8, bf16 16, int8 32

    # ---- batch tiling: pad rows only to the sublane multiple, ragged last tile.
    Bp = _round_up(B, sub)
    if Bp > sub:
        tb = min(batch_tile, _round_up(_cdiv(Bp, 2), sub))   # >= 2 steps for v7x
    else:
        tb = sub
    TB = _round_up(min(tb, Bp), sub)

    def fixed_bytes(tbv):
        return (4 * tbv * Dp * isx         # x full + x chunk, double-buffered
                + 2 * tbv * Op * isx       # output tile, double-buffered
                + tbv * Op * 4)            # f32 accumulator scratch

    while TB > sub and fixed_bytes(TB) > vmem_budget_bytes // 2:
        TB = _round_up(TB // 2, sub)
    grid_b = _cdiv(Bp, TB)

    # ---- gate-N / fc-K reduction split sized against the VMEM budget.
    per_tn = 2 * (Dp + Op) * isw + 2 * 8 * isbg   # streamed Wg/Wf (+bg) per lane of TN
    max_tn = max(128,
                 ((vmem_budget_bytes - fixed_bytes(TB)) // per_tn) // 128 * 128)
    TN = 128
    for t in range(128, Dp + 1, 128):             # largest 128-multiple divisor of Dp
        if Dp % t == 0 and t <= max_tn:
            TN = t
    n_steps = Dp // TN

    # ---- pad x only when actually needed.
    if Bp != B or Dp != D:
        x2 = jnp.pad(x2, ((0, Bp - B), (0, Dp - D)))

    est_vmem = (fixed_bytes(TB) + 2 * Dp * TN * isw + 2 * TN * Op * isw
                + 2 * 8 * TN * isbg + 2 * 8 * Op * isbf)
    vmem_limit = int(min(64 * 1024 * 1024,
                         max(32 * 1024 * 1024, est_vmem + (4 << 20))))

    cost = pl.CostEstimate(
        flops=2 * Bp * Dp * Dp + 2 * Bp * Dp * Op,
        transcendentals=Bp * Dp,                                   # sigmoid
        bytes_accessed=int(2 * Bp * Dp * isx                       # x read twice
                           + grid_b * (Dp * Dp + Dp * Op) * isw    # streamed weights
                           + Dp * isbg + Op * isbf
                           + Bp * Op * isx),
    )

    out_p = pl.pallas_call(
        _gated_head_kernel,
        out_shape=jax.ShapeDtypeStruct((Bp, Op), x2.dtype),
        grid=(grid_b, n_steps),
        in_specs=[
            pl.BlockSpec((TB, Dp), lambda i, n: (i, 0)),   # x rows (full D, gate matmul)
            pl.BlockSpec((TB, TN), lambda i, n: (i, n)),   # x chunk (elementwise gating)
            pl.BlockSpec((Dp, TN), lambda i, n: (0, n)),   # Wg column chunk
            pl.BlockSpec((1, TN), lambda i, n: (0, n)),    # bg chunk
            pl.BlockSpec((TN, Op), lambda i, n: (n, 0)),   # Wf row chunk
            pl.BlockSpec((1, Op), lambda i, n: (0, 0)),    # bf (resident)
        ],
        out_specs=pl.BlockSpec((TB, Op), lambda i, n: (i, 0)),
        scratch_shapes=[pltpu.VMEM((TB, Op), jnp.float32)],
        compiler_params=pltpu.CompilerParams(
            dimension_semantics=("parallel", "arbitrary"),
            vmem_limit_bytes=vmem_limit,
        ),
        cost_estimate=cost,
    )(x2, x2, wg, bg, wf, bf)

    return out_p[:B, :O].reshape(*lead, O)


def gated_head_ref(x, w_gate, b_gate, w_fc, b_fc):
    g = jax.nn.sigmoid(x @ w_gate.T + b_gate)
    return jnp.maximum(g * x, 0.0) @ w_fc.T + b_fc


if __name__ == "__main__":
    B, D, O = 8, 32, 16  # batch, input_dim, output_dim (small test shapes)

    key = jax.random.PRNGKey(0)
    k_x, k_wg, k_bg, k_wf, k_bf = jax.random.split(key, 5)

    x = jax.random.normal(k_x, (B, D), dtype=jnp.float32)

    # nn.Linear layout: weight [out, in], bias [out].
    w_gate = jax.random.normal(k_wg, (D, D), dtype=jnp.float32) * (1.0 / jnp.sqrt(D))
    b_gate = jax.random.normal(k_bg, (D,), dtype=jnp.float32) * 0.01
    w_fc = jax.random.normal(k_wf, (O, D), dtype=jnp.float32) * (1.0 / jnp.sqrt(D))
    b_fc = jax.random.normal(k_bf, (O,), dtype=jnp.float32) * 0.01

    params = prepare_gated_head_params(w_gate, b_gate, w_fc, b_fc)  # one-time prep
    out = jax.block_until_ready(gated_head(x, params))

    ref = gated_head_ref(x, w_gate, b_gate, w_fc, b_fc)
    assert out.shape == (B, O)
    assert jnp.allclose(out, ref, atol=1e-5, rtol=1e-5), "mismatch vs JAX reference"

    print("KERNEL_OK")
</pallas_src>

<mosaic_0001>
module attributes {stable_mosaic.version = 11 : i64} {
  func.func @_gated_head_kernel(%arg0: i32, %arg1: i32, %arg2: memref<8x128xf32, #tpu.memory_space<vmem>>, %arg3: memref<8x128xf32, #tpu.memory_space<vmem>>, %arg4: memref<128x128xf32, #tpu.memory_space<vmem>>, %arg5: memref<1x128xf32, #tpu.memory_space<vmem>>, %arg6: memref<128x128xf32, #tpu.memory_space<vmem>>, %arg7: memref<1x128xf32, #tpu.memory_space<vmem>>, %arg8: memref<8x128xf32, #tpu.memory_space<vmem>>, %arg9: memref<8x128xf32, #tpu.memory_space<vmem>>) attributes {dimension_semantics = [#tpu.dimension_semantics<parallel>, #tpu.dimension_semantics<arbitrary>], iteration_bounds = array<i64: 1, 1>, scalar_prefetch = 0 : i64, scratch_operands = 1 : i64, tpu.core_type = #tpu.core_type<tc>, window_params = [{transform_indices = @transform_0, window_bounds = array<i64: 8, 128>}, {transform_indices = @transform_1, window_bounds = array<i64: 8, 128>}, {transform_indices = @transform_2, window_bounds = array<i64: 128, 128>}, {transform_indices = @transform_3, window_bounds = array<i64: 1, 128>}, {transform_indices = @transform_4, window_bounds = array<i64: 128, 128>}, {pipeline_mode = #tpu.pipeline_mode<synchronous>, transform_indices = @transform_5, window_bounds = array<i64: 1, 128>}, {transform_indices = @transform_6, window_bounds = array<i64: 8, 128>}]} {
    %c0_i32 = arith.constant 0 : i32
    %0 = arith.cmpi eq, %arg1, %c0_i32 : i32
    %1 = arith.extui %0 : i1 to i32
    %c0_i32_0 = arith.constant 0 : i32
    %2 = arith.cmpi ne, %1, %c0_i32_0 : i32
    scf.if %2 {
      %cst_20 = arith.constant 0.000000e+00 : f32
      %28 = vector.broadcast %cst_20 : f32 to vector<8x128xf32>
      %c0_21 = arith.constant 0 : index
      %c0_22 = arith.constant 0 : index
      %29 = vector.load %arg9[%c0_21, %c0_22] : memref<8x128xf32, #tpu.memory_space<vmem>>, vector<8x128xf32>
      tpu.vector_store %arg9[%c0_21, %c0_22], %28 {strides = array<i32>} : memref<8x128xf32, #tpu.memory_space<vmem>>, vector<8x128xf32>,
    } else {
    }
    %c0 = arith.constant 0 : index
    %c0_1 = arith.constant 0 : index
    %3 = vector.load %arg2[%c0, %c0_1] : memref<8x128xf32, #tpu.memory_space<vmem>>, vector<8x128xf32>
    %c0_2 = arith.constant 0 : index
    %c0_3 = arith.constant 0 : index
    %4 = vector.load %arg4[%c0_2, %c0_3] : memref<128x128xf32, #tpu.memory_space<vmem>>, vector<128x128xf32>
    %cst = arith.constant dense<0.000000e+00> : vector<8x128xf32>
    %5 = tpu.matmul %3, %4, %cst {dimension_numbers = #tpu.dot_dimension_numbers<[1], [0], [0], [1], [0, 0, 1, 1], [], []>} : vector<8x128xf32>, vector<128x128xf32>, vector<8x128xf32> -> vector<8x128xf32>
    %c0_4 = arith.constant 0 : index
    %c0_5 = arith.constant 0 : index
    %6 = vector.load %arg5[%c0_4, %c0_5] : memref<1x128xf32, #tpu.memory_space<vmem>>, vector<1x128xf32>
    %7 = vector.broadcast %6 : vector<1x128xf32> to vector<8x128xf32>
    %8 = arith.addf %5, %7 : vector<8x128xf32>
    %9 = arith.negf %8 : vector<8x128xf32>
    %10 = math.exp %9 : vector<8x128xf32>
    %cst_6 = arith.constant 1.000000e+00 : f32
    %11 = vector.broadcast %cst_6 : f32 to vector<8x128xf32>
    %12 = arith.addf %11, %10 : vector<8x128xf32>
    %13 = arith.divf %11, %12 : vector<8x128xf32>
    %c0_7 = arith.constant 0 : index
    %c0_8 = arith.constant 0 : index
    %14 = vector.load %arg3[%c0_7, %c0_8] : memref<8x128xf32, #tpu.memory_space<vmem>>, vector<8x128xf32>
    %cst_9 = arith.constant 0.000000e+00 : f32
    %15 = vector.broadcast %cst_9 : f32 to vector<8x128xf32>
    %16 = arith.cmpf ogt, %14, %15 : vector<8x128xf32>
    %17 = arith.mulf %13, %14 : vector<8x128xf32>
    %cst_10 = arith.constant 0.000000e+00 : f32
    %18 = vector.broadcast %cst_10 : f32 to vector<8x128xf32>
    %19 = arith.select %16, %17, %18 : vector<8x128xi1>, vector<8x128xf32>
    %c0_11 = arith.constant 0 : index
    %c0_12 = arith.constant 0 : index
    %20 = vector.load %arg9[%c0_11, %c0_12] : memref<8x128xf32, #tpu.memory_space<vmem>>, vector<8x128xf32>
    %c0_13 = arith.constant 0 : index
    %c0_14 = arith.constant 0 : index
    %21 = vector.load %arg6[%c0_13, %c0_14] : memref<128x128xf32, #tpu.memory_space<vmem>>, vector<128x128xf32>
    %cst_15 = arith.constant dense<0.000000e+00> : vector<8x128xf32>
    %22 = tpu.matmul %19, %21, %cst_15 {dimension_numbers = #tpu.dot_dimension_numbers<[1], [0], [0], [1], [0, 0, 1, 1], [], []>} : vector<8x128xf32>, vector<128x128xf32>, vector<8x128xf32> -> vector<8x128xf32>
    %23 = arith.addf %20, %22 : vector<8x128xf32>
    %c0_16 = arith.constant 0 : index
    %c0_17 = arith.constant 0 : index
    %24 = vector.load %arg9[%c0_16, %c0_17] : memref<8x128xf32, #tpu.memory_space<vmem>>, vector<8x128xf32>
    tpu.vector_store %arg9[%c0_16, %c0_17], %23 {strides = array<i32>} : memref<8x128xf32, #tpu.memory_space<vmem>>, vector<8x128xf32>,
    %c0_i32_18 = arith.constant 0 : i32
    %25 = arith.cmpi eq, %arg1, %c0_i32_18 : i32
    %26 = arith.extui %25 : i1 to i32
    %c0_i32_19 = arith.constant 0 : i32
    %27 = arith.cmpi ne, %26, %c0_i32_19 : i32
    scf.if %27 {
      %c0_20 = arith.constant 0 : index
      %c0_21 = arith.constant 0 : index
      %28 = vector.load %arg9[%c0_20, %c0_21] : memref<8x128xf32, #tpu.memory_space<vmem>>, vector<8x128xf32>
      %c0_22 = arith.constant 0 : index
      %c0_23 = arith.constant 0 : index
      %29 = vector.load %arg7[%c0_22, %c0_23] : memref<1x128xf32, #tpu.memory_space<vmem>>, vector<1x128xf32>
      %30 = vector.broadcast %29 : vector<1x128xf32> to vector<8x128xf32>
      %31 = arith.addf %28, %30 : vector<8x128xf32>
      %c0_24 = arith.constant 0 : index
      %c0_25 = arith.constant 0 : index
      %32 = vector.load %arg8[%c0_24, %c0_25] : memref<8x128xf32, #tpu.memory_space<vmem>>, vector<8x128xf32>
      tpu.vector_store %arg8[%c0_24, %c0_25], %31 {strides = array<i32>} : memref<8x128xf32, #tpu.memory_space<vmem>>, vector<8x128xf32>,
    } else {
    }
    return
  }
  func.func @transform_0(%arg0: i32, %arg1: i32) -> (i32, i32) {
    %c0_i32 = arith.constant 0 : i32
    %c0_i32_0 = arith.constant 0 : i32
    return %arg0, %c0_i32 : i32, i32
  }
  func.func @transform_1(%arg0: i32, %arg1: i32) -> (i32, i32) {
    %c0_i32 = arith.constant 0 : i32
    return %arg0, %arg1 : i32, i32
  }
  func.func @transform_2(%arg0: i32, %arg1: i32) -> (i32, i32) {
    %c0_i32 = arith.constant 0 : i32
    %c0_i32_0 = arith.constant 0 : i32
    return %c0_i32, %arg1 : i32, i32
  }
  func.func @transform_3(%arg0: i32, %arg1: i32) -> (i32, i32) {
    %c0_i32 = arith.constant 0 : i32
    %c0_i32_0 = arith.constant 0 : i32
    return %c0_i32, %arg1 : i32, i32
  }
  func.func @transform_4(%arg0: i32, %arg1: i32) -> (i32, i32) {
    %c0_i32 = arith.constant 0 : i32
    %c0_i32_0 = arith.constant 0 : i32
    return %arg1, %c0_i32 : i32, i32
  }
  func.func @transform_5(%arg0: i32, %arg1: i32) -> (i32, i32) {
    %c0_i32 = arith.constant 0 : i32
    %c0_i32_0 = arith.constant 0 : i32
    %c0_i32_1 = arith.constant 0 : i32
    return %c0_i32, %c0_i32_0 : i32, i32
  }
  func.func @transform_6(%arg0: i32, %arg1: i32) -> (i32, i32) {
    %c0_i32 = arith.constant 0 : i32
    %c0_i32_0 = arith.constant 0 : i32
    return %arg0, %c0_i32 : i32, i32
  }
}

</mosaic_0001>

<llo_original>
// kernel: tpu_custom_call.1
$region0: #{tpu_custom_call.1}
  #allocation0 [shape = 'u32[]', space=smem, size = 0x4, offset = 0x4, fixed_abs, tag = 'smem constant byte address 0x4 - core index']
  #allocation1 [shape = 'u32[72,128]{1,0:T(1,128)}', space=vmem, size = 0x9000, scoped, tag = 'internal scratch']
  #allocation2 [shape = 'f32[8,128]{1,0:T(8,128)}', space=vmem, size = 0x1000, scoped, tag = 'scratch operand']
  %s0 = inlined_call_operand.hbm [shape: f32[8,128], index: 0, kind: input, shape index: {}]
  %s1 = inlined_call_operand.hbm [shape: f32[8,128], index: 1, kind: input, shape index: {}]
  %s2 = inlined_call_operand.hbm [shape: f32[128,128], index: 2, kind: input, shape index: {}]
  %s3 = inlined_call_operand.vmem [shape: f32[1,128], index: 3, kind: input, shape index: {}]
  %s4 = inlined_call_operand.hbm [shape: f32[128,128], index: 4, kind: input, shape index: {}]
  %s5 = inlined_call_operand.vmem [shape: f32[1,128], index: 5, kind: input, shape index: {}]
  %s6 = inlined_call_operand.hbm [shape: f32[8,128], index: 6, kind: output, shape index: {}]
  %s7 = sld [smem:[#allocation0]]
  $region58: #{tpu_custom_call.1} parent=0
    _
  %s9 = ssub.s32 1, %s7
  %s10 = scalar_select 0, %s9, %s7
  $region1: #{tpu_custom_call.1} parent=0
    #allocation3 [shape = 'u8[4096]{0}', space=vmem, size = 0x1000, scoped, tag = 'input window, operand 0, single buffered']
    #allocation4 [shape = 's32[1]{0}', space=sflag, size = 0x4, scoped, tag = 'scoped memory for tpu_custom_call.1']
    #allocation5 [shape = 's32[1]{0}', space=sflag, size = 0x4, scoped, tag = 'scoped memory for tpu_custom_call.1']
    #allocation6 [shape = 'u8[4096]{0}', space=vmem, size = 0x1000, scoped, tag = 'input window, operand 1, single buffered']
    #allocation7 [shape = 's32[1]{0}', space=sflag, size = 0x4, scoped, tag = 'scoped memory for tpu_custom_call.1']
    #allocation8 [shape = 'u8[65536]{0}', space=vmem, size = 0x10000, scoped, tag = 'input window, operand 2, single buffered']
    #allocation9 [shape = 'u8[65536]{0}', space=vmem, size = 0x10000, scoped, tag = 'input window, operand 4, single buffered']
    #allocation10 [shape = 's32[1]{0}', space=sflag, size = 0x4, scoped, tag = 'scoped memory for tpu_custom_call.1']
    #allocation11 [shape = 'u8[4096]{0}', space=vmem, size = 0x1000, scoped, tag = 'output window, operand 0, single buffered']
    %11 = vsyncpa [#allocation4], 0
    %12 = vsyncpa [#allocation7], 0
    %13 = vsyncpa [#allocation10], 0
    %14 = vsyncpa [#allocation5], 0
    // Predicated region
    $region2: #{tpu_custom_call.1} parent=1 // pred_check
      _
    $region3: #{tpu_custom_call.1} parent=1 // pred_check_branch
      %16 = sbr.rel (0) target = $region5
    $region4: #{tpu_custom_call.1} parent=1 // pred_region
      %18 = vsyncadd [#allocation4], 0
      %s20 = sshll.u32 %s0, 4
      %s21 = int_to_ptr.hbm [resolvable:$true] %s20
      %s22 = sshll.u32 [#allocation3], 4
      %s23 = int_to_ptr.vmem [resolvable:$true] %s22
      %25 = dma.hbm_to_vmem [thread:$0]  %s21, 128, %s23, [#allocation4]
    $region5: #{tpu_custom_call.1} parent=1 // pred_fallthru
      _
    // Predicated region
    $region6: #{tpu_custom_call.1} parent=1 // pred_check
      _
    $region7: #{tpu_custom_call.1} parent=1 // pred_check_branch
      %27 = sbr.rel (0) target = $region9
    $region8: #{tpu_custom_call.1} parent=1 // pred_region
      %29 = vsyncadd [#allocation7], 0
      %s31 = sshll.u32 %s1, 4
      %s32 = int_to_ptr.hbm [resolvable:$true] %s31
      %s33 = sshll.u32 [#allocation6], 4
      %s34 = int_to_ptr.vmem [resolvable:$true] %s33
      %36 = dma.hbm_to_vmem [thread:$0]  %s32, 128, %s34, [#allocation7]
    $region9: #{tpu_custom_call.1} parent=1 // pred_fallthru
      _
    // Predicated region
    $region10: #{tpu_custom_call.1} parent=1 // pred_check
      _
    $region11: #{tpu_custom_call.1} parent=1 // pred_check_branch
      %38 = sbr.rel (0) target = $region13
    $region12: #{tpu_custom_call.1} parent=1 // pred_region
      %40 = vsyncadd [#allocation7], 0
      %s41 = sshll.u32 %s2, 4
      %s42 = int_to_ptr.hbm [resolvable:$true] %s41
      %s43 = sshll.u32 [#allocation8], 4
      %s44 = int_to_ptr.vmem [resolvable:$true] %s43
      %49 = dma.hbm_to_vmem [thread:$0]  %s42, 2048, %s44, [#allocation7], 128, 128, 8
    $region13: #{tpu_custom_call.1} parent=1 // pred_fallthru
      _
    // Predicated region
    $region14: #{tpu_custom_call.1} parent=1 // pred_check
      _
    $region15: #{tpu_custom_call.1} parent=1 // pred_check_branch
      %51 = sbr.rel (0) target = $region17
    $region16: #{tpu_custom_call.1} parent=1 // pred_region
      _
    $region17: #{tpu_custom_call.1} parent=1 // pred_fallthru
      _
    // Predicated region
    $region18: #{tpu_custom_call.1} parent=1 // pred_check
      _
    $region19: #{tpu_custom_call.1} parent=1 // pred_check_branch
      %53 = sbr.rel (0) target = $region21
    $region20: #{tpu_custom_call.1} parent=1 // pred_region
      %55 = vsyncadd [#allocation10], 0
      %s56 = sshll.u32 %s4, 4
      %s57 = int_to_ptr.hbm [resolvable:$true] %s56
      %s58 = sshll.u32 [#allocation9], 4
      %s59 = int_to_ptr.vmem [resolvable:$true] %s58
      %64 = dma.hbm_to_vmem [thread:$0]  %s57, 2048, %s59, [#allocation10], 128, 128, 8
    $region21: #{tpu_custom_call.1} parent=1 // pred_fallthru
      _
    // Predicated region
    $region22: #{tpu_custom_call.1} parent=1 // pred_check
      _
    $region23: #{tpu_custom_call.1} parent=1 // pred_check_branch
      %66 = sbr.rel (0) target = $region25
    $region24: #{tpu_custom_call.1} parent=1 // pred_region
      _
    $region25: #{tpu_custom_call.1} parent=1 // pred_fallthru
      _
    // Predicated region
    $region26: #{tpu_custom_call.1} parent=1 // pred_check
      _
    $region27: #{tpu_custom_call.1} parent=1 // pred_check_branch
      %68 = sbr.rel (0) target = $region29
    $region28: #{tpu_custom_call.1} parent=1 // pred_region
      %70 = dma.done [#allocation4], 128
    $region29: #{tpu_custom_call.1} parent=1 // pred_fallthru
      _
    // Predicated region
    $region30: #{tpu_custom_call.1} parent=1 // pred_check
      _
    $region31: #{tpu_custom_call.1} parent=1 // pred_check_branch
      %72 = sbr.rel (0) target = $region33
    $region32: #{tpu_custom_call.1} parent=1 // pred_region
      %74 = dma.done [#allocation7], 128
    $region33: #{tpu_custom_call.1} parent=1 // pred_fallthru
      _
    // Predicated region
    $region34: #{tpu_custom_call.1} parent=1 // pred_check
      _
    $region35: #{tpu_custom_call.1} parent=1 // pred_check_branch
      %76 = sbr.rel (0) target = $region37
    $region36: #{tpu_custom_call.1} parent=1 // pred_region
      %78 = dma.done [#allocation7], 2048
    $region37: #{tpu_custom_call.1} parent=1 // pred_fallthru
      _
    // Predicated region
    $region38: #{tpu_custom_call.1} parent=1 // pred_check
      _
    $region39: #{tpu_custom_call.1} parent=1 // pred_check_branch
      %80 = sbr.rel (0) target = $region41
    $region40: #{tpu_custom_call.1} parent=1 // pred_region
      %82 = dma.done [#allocation10], 2048
    $region41: #{tpu_custom_call.1} parent=1 // pred_fallthru
      _
    %p83 = scmp.eq.s32.totalorder 0, 0
    // Predicated region
    $region42: #{tpu_custom_call.1} parent=1 // pred_check
      %p84 = pneg %p83
    $region43: #{tpu_custom_call.1} parent=1 // pred_check_branch
      %86 = sbr.rel (%p84) target = $region45
    $region44: #{tpu_custom_call.1} parent=1 // pred_region
      %87 = vst [vmem:[#allocation2] sm:$0xff] 0.0
    $region45: #{tpu_custom_call.1} parent=1 // pred_fallthru
      _
    %v88 = vld [vmem:[#allocation3] sm:$0xff]
    %v89 = vld [vmem:[#allocation8] sm:$0xff]
    %v90 = vld [vmem:[#allocation8 + $0x8] sm:$0xff]
    %v91 = vld [vmem:[#allocation8 + $0x10] sm:$0xff]
    %v92 = vld [vmem:[#allocation8 + $0x18] sm:$0xff]
    %v93 = vld [vmem:[#allocation8 + $0x20] sm:$0xff]
    %v94 = vld [vmem:[#allocation8 + $0x28] sm:$0xff]
    %v95 = vld [vmem:[#allocation8 + $0x30] sm:$0xff]
    %v96 = vld [vmem:[#allocation8 + $0x38] sm:$0xff]
    %v97 = vld [vmem:[#allocation8 + $0x40] sm:$0xff]
    %v98 = vld [vmem:[#allocation8 + $0x48] sm:$0xff]
    %v99 = vld [vmem:[#allocation8 + $0x50] sm:$0xff]
    %v100 = vld [vmem:[#allocation8 + $0x58] sm:$0xff]
    %v101 = vld [vmem:[#allocation8 + $0x60] sm:$0xff]
    %v102 = vld [vmem:[#allocation8 + $0x68] sm:$0xff]
    %v103 = vld [vmem:[#allocation8 + $0x70] sm:$0xff]
    %v104 = vld [vmem:[#allocation8 + $0x78] sm:$0xff]
    %v105 = vld [vmem:[%s3] sm:$0x1]
    %v107 = vperm.slane %v105, 0
    %109 = vmatpush.msra.mxu0 %v104
    %110 = vmatpush.msra.mxu0 %v103
    %111 = vmatpush.msra.mxu0 %v102
    %112 = vmatpush.msra.mxu0 %v101
    %113 = vmatpush.msra.mxu0 %v100
    %114 = vmatpush.msra.mxu0 %v99
    %115 = vmatpush.msra.mxu0 %v98
    %116 = vmatpush.msra.mxu0 %v97
    %117 = vmatpush.msra.mxu0 %v96
    %118 = vmatpush.msra.mxu0 %v95
    %119 = vmatpush.msra.mxu0 %v94
    %120 = vmatpush.msra.mxu0 %v93
    %121 = vmatpush.msra.mxu0 %v92
    %122 = vmatpush.msra.mxu0 %v91
    %123 = vmatpush.msra.mxu0 %v90
    %124 = vmatpush.msra.mxu0 %v89
    %125 = vmatmul.f32.gmra.mxu0 %v88
    %v126 = vpop.f32.mrf.mxu0
    %v127 = vadd.f32 %v107, %v126
    %128 = vdwg.mxu0
    %v129 = vxor.u32 %v127, 2147483648
    %v130 = vmul.f32 %v129, 1.442695
    %v131 = vpow.pop %v130
    %v132 = vadd.f32 %v131, 1.0
    %v133 = vrcp.pop %v132
    %v134 = vmul.f32 %v132, %v133
    %v135 = vsub.f32 1.0, %v134
    %v136 = vmul.f32 %v133, %v135
    %v137 = vadd.f32 %v133, %v136
    %vm138 = vweird.f32 %v132
    %vm139 = vweird.f32 %v133
    %vm140 = vmor %vm138, %vm139
    %v141 = vsel %vm140, %v133, %v137
    %v142 = vand.u32 2147483647, %v132
    %vm143 = vcmp.eq.f32.partialorder %v142, 8.507059e+37
    %v144 = vand.u32 %v132, 2147483648
    %v145 = vor.u32 1.1754944e-38, %v144
    %v146 = vsel %vm143, %v145, %v141
    %v147 = vmul.f32 1.0, %v146
    %v148 = vld [vmem:[#allocation6] sm:$0xff]
    %vm149 = vcmp.gt.f32.partialorder %v148, 0.0
    %v150 = vmul.f32 %v147, %v148
    %v151 = vsel %vm149, %v150, 0.0
    %v152 = vld [vmem:[#allocation2] sm:$0xff]
    %v153 = vld [vmem:[#allocation9] sm:$0xff]
    %v154 = vld [vmem:[#allocation9 + $0x8] sm:$0xff]
    %v155 = vld [vmem:[#allocation9 + $0x10] sm:$0xff]
    %v156 = vld [vmem:[#allocation9 + $0x18] sm:$0xff]
    %v157 = vld [vmem:[#allocation9 + $0x20] sm:$0xff]
    %v158 = vld [vmem:[#allocation9 + $0x28] sm:$0xff]
    %v159 = vld [vmem:[#allocation9 + $0x30] sm:$0xff]
    %v160 = vld [vmem:[#allocation9 + $0x38] sm:$0xff]
    %v161 = vld [vmem:[#allocation9 + $0x40] sm:$0xff]
    %v162 = vld [vmem:[#allocation9 + $0x48] sm:$0xff]
    %v163 = vld [vmem:[#allocation9 + $0x50] sm:$0xff]
    %v164 = vld [vmem:[#allocation9 + $0x58] sm:$0xff]
    %v165 = vld [vmem:[#allocation9 + $0x60] sm:$0xff]
    %v166 = vld [vmem:[#allocation9 + $0x68] sm:$0xff]
    %v167 = vld [vmem:[#allocation9 + $0x70] sm:$0xff]
    %v168 = vld [vmem:[#allocation9 + $0x78] sm:$0xff]
    %169 = vmatpush.msra.mxu0 %v168
    %170 = vmatpush.msra.mxu0 %v167
    %171 = vmatpush.msra.mxu0 %v166
    %172 = vmatpush.msra.mxu0 %v165
    %173 = vmatpush.msra.mxu0 %v164
    %174 = vmatpush.msra.mxu0 %v163
    %175 = vmatpush.msra.mxu0 %v162
    %176 = vmatpush.msra.mxu0 %v161
    %177 = vmatpush.msra.mxu0 %v160
    %178 = vmatpush.msra.mxu0 %v159
    %179 = vmatpush.msra.mxu0 %v158
    %180 = vmatpush.msra.mxu0 %v157
    %181 = vmatpush.msra.mxu0 %v156
    %182 = vmatpush.msra.mxu0 %v155
    %183 = vmatpush.msra.mxu0 %v154
    %184 = vmatpush.msra.mxu0 %v153
    %185 = vmatmul.f32.gmra.mxu0 %v151
    %v186 = vpop.f32.mrf.mxu0
    %v187 = vadd.f32 0.0, %v186
    %188 = vdwg.mxu0
    %v189 = vadd.f32 %v152, %v187
    %190 = vst [vmem:[#allocation2] sm:$0xff] %v189
    // Predicated region
    $region46: #{tpu_custom_call.1} parent=1 // pred_check
      %p191 = pneg %p83
    $region47: #{tpu_custom_call.1} parent=1 // pred_check_branch
      %193 = sbr.rel (%p191) target = $region49
    $region48: #{tpu_custom_call.1} parent=1 // pred_region
      %v194 = vld [vmem:[#allocation2] sm:$0xff]
      %v195 = vld [vmem:[%s5] sm:$0x1]
      %v197 = vperm.slane %v195, 0
      %v199 = vadd.f32 %v194, %v197
      %200 = vst [vmem:[#allocation11] sm:$0xff] %v199
    $region49: #{tpu_custom_call.1} parent=1 // pred_fallthru
      _
    // Predicated region
    $region50: #{tpu_custom_call.1} parent=1 // pred_check
      _
    $region51: #{tpu_custom_call.1} parent=1 // pred_check_branch
      %202 = sbr.rel (0) target = $region53
    $region52: #{tpu_custom_call.1} parent=1 // pred_region
      %204 = vsyncadd [#allocation5], 0
      %s206 = sshll.u32 [#allocation11], 4
      %s207 = int_to_ptr.vmem [resolvable:$true] %s206
      %s208 = sshll.u32 %s6, 4
      %s209 = int_to_ptr.hbm [resolvable:$true] %s208
      %211 = dma.vmem_to_hbm [thread:$0]  %s207, 128, %s209, [#allocation5]
    $region53: #{tpu_custom_call.1} parent=1 // pred_fallthru
      _
    // Predicated region
    $region54: #{tpu_custom_call.1} parent=1 // pred_check
      _
    $region55: #{tpu_custom_call.1} parent=1 // pred_check_branch
      %213 = sbr.rel (0) target = $region57
    $region56: #{tpu_custom_call.1} parent=1 // pred_region
      %215 = dma.done [#allocation5], 128
    $region57: #{tpu_custom_call.1} parent=1 // pred_fallthru
      _
    %216 = vsyncpa [#allocation4], 1
    %217 = vsyncpa [#allocation7], 1
    %218 = vsyncpa [#allocation10], 1
    %219 = vsyncpa [#allocation5], 1

</llo_original>
